<compile_context>
chip_gen: v7x
topology: tpu7x:2x2x1
jax: 0.10.0
libtpu: 0.0.40
codegen_flags: <defaults>
</compile_context>

<pallas_src>
import functools
import jax
import jax.numpy as jnp
from jax.experimental import pallas as pl
from jax.experimental.pallas import tpu as pltpu

LANE = 128
SUBLANE = 8


def _round_up(n, m):
    return ((n + m - 1) // m) * m


# ---------------- fused Pallas kernel ----------------

def _fused_prefix_kernel(*refs, relu_flags, stage_dins, fold_mean, num_ch, hw):
    """refs = (x_ref, w1t_ref, b1_ref, w2t_ref, b2_ref, ..., o_ref).

    x_ref:  [TB, C*H*W]          flattened input tile (f32)
    wNt:    [din_N, dout_pad_N]  pre-transposed bf16 weights (lane-padded outputs only)
    bN:     [1, dout_pad_N]      f32 bias (lane-padded)
    o_ref:  [TB, dout_pad_last]  lane-dense f32 output slab
    """
    x_ref = refs[0]
    o_ref = refs[-1]
    x = x_ref[...].astype(jnp.float32)

    if fold_mean:
        # channel mean via static lane-slice adds on the VPU (hw is lane-aligned)
        h = x[:, 0:hw]
        for c in range(1, num_ch):
            h = h + x[:, c * hw:(c + 1) * hw]
        h = h * (1.0 / num_ch)
    else:
        h = x

    for s, (apply_relu, din) in enumerate(zip(relu_flags, stage_dins)):
        wt = refs[1 + 2 * s][...]                      # [din, dout_pad]  (bf16)
        b = refs[2 + 2 * s][...].astype(jnp.float32)   # [1, dout_pad]
        hs = h if h.shape[1] == din else h[:, :din]    # drop lane padding, static slice
        h = jnp.dot(hs.astype(wt.dtype), wt, preferred_element_type=jnp.float32) + b
        if apply_relu:
            h = jnp.maximum(h, 0.0)

    o_ref[...] = h.astype(o_ref.dtype)


# ---------------- setup (runs once, not per forward) ----------------

def prepare_subnet(layers, layer_i, x_shape, weight_dtype=jnp.bfloat16):
    """Group the layer prefix into Linear(+ReLU) stages, pre-transpose weights to
    [Din, Dout], pad only the output (lane) dim to 128 and cast weights to bf16."""
    B, C, H, W = x_shape
    prefix = list(layers[: layer_i + 1])

    stages = []
    i = 0
    while i < len(prefix):
        if prefix[i][0] == "linear":
            w, b = prefix[i][1], prefix[i][2]
            fuse_relu = (i + 1 < len(prefix)) and (prefix[i + 1][0] == "relu")
            stages.append([w, b, fuse_relu])
            i += 2 if fuse_relu else 1
        else:  # standalone ReLU
            assert stages, "Subnet prefix cannot start with a ReLU"
            stages[-1][2] = True
            i += 1

    fold_mean = (C == 3)          # matches `if x.size(1) == 3: x = x.mean(1, keepdim=True)`
    flat_in = C * H * W           # width of flattened x fed to the kernel
    first_din = (H * W) if fold_mean else flat_in

    weights = []
    relu_flags = []
    stage_dins = []
    out_true = out_pad = None
    for s, (w, b, fuse_relu) in enumerate(stages):
        dout, din = w.shape
        if s == 0:
            assert din == first_din, (din, first_din)
        dout_pad = _round_up(dout, LANE)
        wt = jnp.pad(jnp.asarray(w, jnp.float32).T, ((0, 0), (0, dout_pad - dout)))
        bp = jnp.pad(jnp.asarray(b, jnp.float32), (0, dout_pad - dout)).reshape(1, dout_pad)
        weights.append((wt.astype(weight_dtype), bp))    # bf16 weight, f32 bias
        relu_flags.append(bool(fuse_relu))
        stage_dins.append(int(din))
        out_true, out_pad = int(dout), int(dout_pad)

    return {
        "flat_in": flat_in,
        "fold_mean": fold_mean,
        "num_ch": C,
        "hw": H * W,
        "weights": weights,
        "relu_flags": tuple(relu_flags),
        "stage_dins": tuple(stage_dins),
        "out_pad": out_pad,
        "out_true": out_true,
    }


# ---------------- forward ----------------

def make_subnet_forward(prep, vmem_budget_bytes=24 << 20, vmem_limit_bytes=32 << 20):
    """Build a jitted forward: single fused pallas_call over a batch-tiled grid."""
    weights = prep["weights"]
    flat_in = prep["flat_in"]
    out_pad = prep["out_pad"]
    out_true = prep["out_true"]
    weight_bytes = sum(int(w.size) * w.dtype.itemsize + int(b.size) * b.dtype.itemsize
                       for w, b in weights)

    kern = functools.partial(
        _fused_prefix_kernel,
        relu_flags=prep["relu_flags"],
        stage_dins=prep["stage_dins"],
        fold_mean=prep["fold_mean"],
        num_ch=prep["num_ch"],
        hw=prep["hw"],
    )

    @jax.jit
    def fwd(x):
        B = x.shape[0]
        x_flat = x.reshape(B, -1).astype(jnp.float32)
        assert x_flat.shape[1] == flat_in, (x_flat.shape, flat_in)

        # MXU-shaped batch tile: multiple of 8 sublanes, capped so the
        # double-buffered x/out blocks plus resident weights fit the VMEM budget.
        tb = min(_round_up(B, SUBLANE), 256)
        while tb > SUBLANE:
            need = 2 * tb * flat_in * 4 + 2 * tb * out_pad * 4 + weight_bytes
            if need <= vmem_budget_bytes:
                break
            tb = _round_up(tb // 2, SUBLANE)

        b_pad = _round_up(B, tb)
        if b_pad != B:
            x_flat = jnp.pad(x_flat, ((0, b_pad - B), (0, 0)))

        args = [x_flat]
        in_specs = [pl.BlockSpec((tb, flat_in), lambda i: (i, 0))]
        for wt, bias in weights:
            args.append(wt)
            in_specs.append(pl.BlockSpec(wt.shape, lambda i: (0, 0)))   # resident
            args.append(bias)
            in_specs.append(pl.BlockSpec(bias.shape, lambda i: (0, 0)))  # resident

        y_pad = pl.pallas_call(
            kern,
            out_shape=jax.ShapeDtypeStruct((b_pad, out_pad), jnp.float32),
            grid=(b_pad // tb,),
            in_specs=in_specs,
            out_specs=pl.BlockSpec((tb, out_pad), lambda i: (i, 0)),
            compiler_params=pltpu.CompilerParams(
                dimension_semantics=("parallel",),
                vmem_limit_bytes=vmem_limit_bytes),
        )(*args)
        # slice the lane-dense padded slab back to the true output width / batch
        return y_pad[:B, :out_true]

    return fwd


# ---------------- model construction (deterministic, synthetic) ----------------

def make_mlp_layers(key, in_dim, hidden, out_dim):
    """Mirror of REPAIR MLP .layers:
       [Linear(in,h), ReLU, Linear(h,h), ReLU, Linear(h,out)]"""
    layers = []
    dims = [(in_dim, hidden), (hidden, hidden), (hidden, out_dim)]
    ks = jax.random.split(key, len(dims) * 2)
    for idx, (di, do) in enumerate(dims):
        bound = 1.0 / (di ** 0.5)  # torch.nn.Linear default init range
        w = jax.random.uniform(ks[2 * idx], (do, di), jnp.float32, -bound, bound)
        b = jax.random.uniform(ks[2 * idx + 1], (do,), jnp.float32, -bound, bound)
        layers.append(("linear", w, b))
        if idx < len(dims) - 1:
            layers.append(("relu",))
    return layers


# ---------------- main ----------------

if __name__ == "__main__":
    key = jax.random.PRNGKey(0)
    kx, kp = jax.random.split(key)

    B, C, H, W = 2, 3, 16, 16          # 3-channel input -> channel-mean branch
    hidden, out_dim = 32, 10
    x = jax.random.normal(kx, (B, C, H, W), jnp.float32)

    layers = make_mlp_layers(kp, H * W, hidden, out_dim)

    # pure-JAX f32 reference for the prefixes
    xr0 = jnp.mean(x, axis=1).reshape(B, -1)
    h1 = jnp.maximum(xr0 @ layers[0][1].T + layers[0][2], 0.0)
    h2 = jnp.maximum(h1 @ layers[2][1].T + layers[2][2], 0.0)
    h3 = h2 @ layers[4][1].T + layers[4][2]

    # prefix ending in ReLU (layers[:4] = Linear, ReLU, Linear, ReLU)
    prep4 = prepare_subnet(layers, layer_i=3, x_shape=(B, C, H, W))
    fwd4 = make_subnet_forward(prep4)
    y4 = jax.block_until_ready(fwd4(x))
    assert y4.shape == (B, hidden), y4.shape
    assert jnp.allclose(y4, h2, atol=2e-2, rtol=2e-2)   # bf16 weights -> looser tol

    # full prefix (layers[:5] = ... Linear(32,10), no trailing ReLU)
    prep5 = prepare_subnet(layers, layer_i=4, x_shape=(B, C, H, W))
    fwd5 = make_subnet_forward(prep5)
    y5 = jax.block_until_ready(fwd5(x))
    assert y5.shape == (B, out_dim), y5.shape
    assert jnp.allclose(y5, h3, atol=2e-2, rtol=2e-2)

    print("KERNEL_OK")
</pallas_src>

<mosaic_0001>
module attributes {stable_mosaic.version = 11 : i64} {
  func.func @_fused_prefix_kernel(%arg0: i32, %arg1: memref<8x768xf32, #tpu.memory_space<vmem>>, %arg2: memref<256x128xbf16, #tpu.memory_space<vmem>>, %arg3: memref<1x128xf32, #tpu.memory_space<vmem>>, %arg4: memref<32x128xbf16, #tpu.memory_space<vmem>>, %arg5: memref<1x128xf32, #tpu.memory_space<vmem>>, %arg6: memref<8x128xf32, #tpu.memory_space<vmem>>) attributes {dimension_semantics = [#tpu.dimension_semantics<parallel>], iteration_bounds = array<i64: 1>, scalar_prefetch = 0 : i64, scratch_operands = 0 : i64, tpu.core_type = #tpu.core_type<tc>, window_params = [{transform_indices = @transform_0, window_bounds = array<i64: 8, 768>}, {pipeline_mode = #tpu.pipeline_mode<synchronous>, transform_indices = @transform_1, window_bounds = array<i64: 256, 128>}, {pipeline_mode = #tpu.pipeline_mode<synchronous>, transform_indices = @transform_2, window_bounds = array<i64: 1, 128>}, {pipeline_mode = #tpu.pipeline_mode<synchronous>, transform_indices = @transform_3, window_bounds = array<i64: 32, 128>}, {pipeline_mode = #tpu.pipeline_mode<synchronous>, transform_indices = @transform_4, window_bounds = array<i64: 1, 128>}, {transform_indices = @transform_5, window_bounds = array<i64: 8, 128>}]} {
    %c0 = arith.constant 0 : index
    %c0_0 = arith.constant 0 : index
    %0 = vector.load %arg1[%c0, %c0_0] : memref<8x768xf32, #tpu.memory_space<vmem>>, vector<8x768xf32>
    %1 = vector.extract_strided_slice %0 {offsets = [0, 0], sizes = [8, 256], strides = [1, 1]} : vector<8x768xf32> to vector<8x256xf32>
    %2 = vector.extract_strided_slice %0 {offsets = [0, 256], sizes = [8, 256], strides = [1, 1]} : vector<8x768xf32> to vector<8x256xf32>
    %3 = arith.addf %1, %2 : vector<8x256xf32>
    %4 = vector.extract_strided_slice %0 {offsets = [0, 512], sizes = [8, 256], strides = [1, 1]} : vector<8x768xf32> to vector<8x256xf32>
    %5 = arith.addf %3, %4 : vector<8x256xf32>
    %cst = arith.constant 0.333333343 : f32
    %6 = vector.broadcast %cst : f32 to vector<8x256xf32>
    %7 = arith.mulf %5, %6 : vector<8x256xf32>
    %c0_1 = arith.constant 0 : index
    %c0_2 = arith.constant 0 : index
    %8 = vector.load %arg2[%c0_1, %c0_2] : memref<256x128xbf16, #tpu.memory_space<vmem>>, vector<256x128xbf16>
    %c0_3 = arith.constant 0 : index
    %c0_4 = arith.constant 0 : index
    %9 = vector.load %arg3[%c0_3, %c0_4] : memref<1x128xf32, #tpu.memory_space<vmem>>, vector<1x128xf32>
    %10 = arith.truncf %7 : vector<8x256xf32> to vector<8x256xbf16>
    %cst_5 = arith.constant dense<0.000000e+00> : vector<8x128xf32>
    %11 = tpu.matmul %10, %8, %cst_5 {dimension_numbers = #tpu.dot_dimension_numbers<[1], [0], [0], [1], [0, 0, 1, 1], [], []>} : vector<8x256xbf16>, vector<256x128xbf16>, vector<8x128xf32> -> vector<8x128xf32>
    %12 = vector.broadcast %9 : vector<1x128xf32> to vector<8x128xf32>
    %13 = arith.addf %11, %12 : vector<8x128xf32>
    %cst_6 = arith.constant 0.000000e+00 : f32
    %14 = vector.broadcast %cst_6 : f32 to vector<8x128xf32>
    %15 = arith.maximumf %13, %14 : vector<8x128xf32>
    %c0_7 = arith.constant 0 : index
    %c0_8 = arith.constant 0 : index
    %16 = vector.load %arg4[%c0_7, %c0_8] : memref<32x128xbf16, #tpu.memory_space<vmem>>, vector<32x128xbf16>
    %c0_9 = arith.constant 0 : index
    %c0_10 = arith.constant 0 : index
    %17 = vector.load %arg5[%c0_9, %c0_10] : memref<1x128xf32, #tpu.memory_space<vmem>>, vector<1x128xf32>
    %18 = vector.extract_strided_slice %15 {offsets = [0, 0], sizes = [8, 32], strides = [1, 1]} : vector<8x128xf32> to vector<8x32xf32>
    %19 = arith.truncf %18 : vector<8x32xf32> to vector<8x32xbf16>
    %cst_11 = arith.constant dense<0.000000e+00> : vector<8x128xf32>
    %20 = tpu.matmul %19, %16, %cst_11 {dimension_numbers = #tpu.dot_dimension_numbers<[1], [0], [0], [1], [0, 0, 1, 1], [], []>} : vector<8x32xbf16>, vector<32x128xbf16>, vector<8x128xf32> -> vector<8x128xf32>
    %21 = vector.broadcast %17 : vector<1x128xf32> to vector<8x128xf32>
    %22 = arith.addf %20, %21 : vector<8x128xf32>
    %cst_12 = arith.constant 0.000000e+00 : f32
    %23 = vector.broadcast %cst_12 : f32 to vector<8x128xf32>
    %24 = arith.maximumf %22, %23 : vector<8x128xf32>
    %c0_13 = arith.constant 0 : index
    %c0_14 = arith.constant 0 : index
    %25 = vector.load %arg6[%c0_13, %c0_14] : memref<8x128xf32, #tpu.memory_space<vmem>>, vector<8x128xf32>
    tpu.vector_store %arg6[%c0_13, %c0_14], %24 {strides = array<i32>} : memref<8x128xf32, #tpu.memory_space<vmem>>, vector<8x128xf32>,
    return
  }
  func.func @transform_0(%arg0: i32) -> (i32, i32) {
    %c0_i32 = arith.constant 0 : i32
    %c0_i32_0 = arith.constant 0 : i32
    return %arg0, %c0_i32 : i32, i32
  }
  func.func @transform_1(%arg0: i32) -> (i32, i32) {
    %c0_i32 = arith.constant 0 : i32
    %c0_i32_0 = arith.constant 0 : i32
    %c0_i32_1 = arith.constant 0 : i32
    return %c0_i32, %c0_i32_0 : i32, i32
  }
  func.func @transform_2(%arg0: i32) -> (i32, i32) {
    %c0_i32 = arith.constant 0 : i32
    %c0_i32_0 = arith.constant 0 : i32
    %c0_i32_1 = arith.constant 0 : i32
    return %c0_i32, %c0_i32_0 : i32, i32
  }
  func.func @transform_3(%arg0: i32) -> (i32, i32) {
    %c0_i32 = arith.constant 0 : i32
    %c0_i32_0 = arith.constant 0 : i32
    %c0_i32_1 = arith.constant 0 : i32
    return %c0_i32, %c0_i32_0 : i32, i32
  }
  func.func @transform_4(%arg0: i32) -> (i32, i32) {
    %c0_i32 = arith.constant 0 : i32
    %c0_i32_0 = arith.constant 0 : i32
    %c0_i32_1 = arith.constant 0 : i32
    return %c0_i32, %c0_i32_0 : i32, i32
  }
  func.func @transform_5(%arg0: i32) -> (i32, i32) {
    %c0_i32 = arith.constant 0 : i32
    %c0_i32_0 = arith.constant 0 : i32
    return %arg0, %c0_i32 : i32, i32
  }
}

</mosaic_0001>

<llo_original>
// kernel: fwd.1
$region0: #{fwd.1}
  #allocation0 [shape = 'u32[]', space=smem, size = 0x4, offset = 0x4, fixed_abs, tag = 'smem constant byte address 0x4 - core index']
  #allocation1 [shape = 'u32[144,128]{1,0:T(1,128)}', space=vmem, size = 0x12000, scoped, tag = 'internal scratch']
  %s0 = inlined_call_operand.vmem [shape: f32[8,768], index: 0, kind: input, shape index: {}]
  %s1 = inlined_call_operand.vmem [shape: bf16[256,128], index: 1, kind: input, shape index: {}]
  %s2 = inlined_call_operand.vmem [shape: f32[1,128], index: 2, kind: input, shape index: {}]
  %s3 = inlined_call_operand.vmem [shape: bf16[32,128], index: 3, kind: input, shape index: {}]
  %s4 = inlined_call_operand.vmem [shape: f32[1,128], index: 4, kind: input, shape index: {}]
  %s5 = inlined_call_operand.vmem [shape: f32[8,128], index: 5, kind: output, shape index: {}]
  %s6 = sld [smem:[#allocation0]]
  $region30: #{fwd.1} parent=0
    _
  %s8 = ssub.s32 1, %s6
  %s9 = scalar_select 0, %s8, %s6
  // Predicated region
  $region2: #{fwd.1} parent=0 // pred_check
    _
  $region3: #{fwd.1} parent=0 // pred_check_branch
    %11 = sbr.rel (0) target = $region5
  $region4: #{fwd.1} parent=0 // pred_region
    _
  $region5: #{fwd.1} parent=0 // pred_fallthru
    _
  // Predicated region
  $region6: #{fwd.1} parent=0 // pred_check
    _
  $region7: #{fwd.1} parent=0 // pred_check_branch
    %13 = sbr.rel (0) target = $region9
  $region8: #{fwd.1} parent=0 // pred_region
    _
  $region9: #{fwd.1} parent=0 // pred_fallthru
    _
  // Predicated region
  $region10: #{fwd.1} parent=0 // pred_check
    _
  $region11: #{fwd.1} parent=0 // pred_check_branch
    %15 = sbr.rel (0) target = $region13
  $region12: #{fwd.1} parent=0 // pred_region
    _
  $region13: #{fwd.1} parent=0 // pred_fallthru
    _
  // Predicated region
  $region14: #{fwd.1} parent=0 // pred_check
    _
  $region15: #{fwd.1} parent=0 // pred_check_branch
    %17 = sbr.rel (0) target = $region17
  $region16: #{fwd.1} parent=0 // pred_region
    _
  $region17: #{fwd.1} parent=0 // pred_fallthru
    _
  // Predicated region
  $region18: #{fwd.1} parent=0 // pred_check
    _
  $region19: #{fwd.1} parent=0 // pred_check_branch
    %19 = sbr.rel (0) target = $region21
  $region20: #{fwd.1} parent=0 // pred_region
    _
  $region21: #{fwd.1} parent=0 // pred_fallthru
    _
  %v21 = vld [vmem:[%s0] sm:$0xff]
  %v22 = vld [vmem:[%s0 + $0x8] sm:$0xff]
  %v23 = vld [vmem:[%s0 + $0x10] sm:$0xff]
  %v24 = vld [vmem:[%s0 + $0x18] sm:$0xff]
  %v25 = vld [vmem:[%s0 + $0x20] sm:$0xff]
  %v26 = vld [vmem:[%s0 + $0x28] sm:$0xff]
  %v27 = vadd.f32 %v21, %v23
  %v28 = vadd.f32 %v22, %v24
  %v29 = vadd.f32 %v27, %v25
  %v30 = vadd.f32 %v28, %v26
  %v31 = vmul.f32 %v29, 0.33333334
  %v32 = vmul.f32 %v30, 0.33333334
  %v33 = vld [vmem:[%s1] sm:$0xf]
  %v34 = vld [vmem:[%s1 + $0x4] sm:$0xf]
  %v35 = vld [vmem:[%s1 + $0x8] sm:$0xf]
  %v36 = vld [vmem:[%s1 + $0xc] sm:$0xf]
  %v37 = vld [vmem:[%s1 + $0x10] sm:$0xf]
  %v38 = vld [vmem:[%s1 + $0x14] sm:$0xf]
  %v39 = vld [vmem:[%s1 + $0x18] sm:$0xf]
  %v40 = vld [vmem:[%s1 + $0x1c] sm:$0xf]
  %v41 = vld [vmem:[%s1 + $0x20] sm:$0xf]
  %v42 = vld [vmem:[%s1 + $0x24] sm:$0xf]
  %v43 = vld [vmem:[%s1 + $0x28] sm:$0xf]
  %v44 = vld [vmem:[%s1 + $0x2c] sm:$0xf]
  %v45 = vld [vmem:[%s1 + $0x30] sm:$0xf]
  %v46 = vld [vmem:[%s1 + $0x34] sm:$0xf]
  %v47 = vld [vmem:[%s1 + $0x38] sm:$0xf]
  %v48 = vld [vmem:[%s1 + $0x3c] sm:$0xf]
  %v49 = vld [vmem:[%s1 + $0x40] sm:$0xf]
  %v50 = vld [vmem:[%s1 + $0x44] sm:$0xf]
  %v51 = vld [vmem:[%s1 + $0x48] sm:$0xf]
  %v52 = vld [vmem:[%s1 + $0x4c] sm:$0xf]
  %v53 = vld [vmem:[%s1 + $0x50] sm:$0xf]
  %v54 = vld [vmem:[%s1 + $0x54] sm:$0xf]
  %v55 = vld [vmem:[%s1 + $0x58] sm:$0xf]
  %v56 = vld [vmem:[%s1 + $0x5c] sm:$0xf]
  %v57 = vld [vmem:[%s1 + $0x60] sm:$0xf]
  %v58 = vld [vmem:[%s1 + $0x64] sm:$0xf]
  %v59 = vld [vmem:[%s1 + $0x68] sm:$0xf]
  %v60 = vld [vmem:[%s1 + $0x6c] sm:$0xf]
  %v61 = vld [vmem:[%s1 + $0x70] sm:$0xf]
  %v62 = vld [vmem:[%s1 + $0x74] sm:$0xf]
  %v63 = vld [vmem:[%s1 + $0x78] sm:$0xf]
  %v64 = vld [vmem:[%s1 + $0x7c] sm:$0xf]
  %v65 = vld [vmem:[%s2] sm:$0x1]
  %v66 = vpack.c.bf16 %v31, %v31
  %v67 = vpack.c.bf16 %v32, %v32
  %v69 = vlaneseq
  %v70 = vshrl.u32 %v69, 7
  %v71 = vsub.s32 0, %v70
  %v72 = vrot.slane %v65, %v71
  %v106 = vunpack.c.l.b16 %v33
  %v107 = vunpack.c.l.b16 %v34
  %v108 = vunpack.c.l.b16 %v35
  %v109 = vunpack.c.l.b16 %v36
  %v110 = vunpack.c.l.b16 %v37
  %v111 = vunpack.c.l.b16 %v38
  %v112 = vunpack.c.l.b16 %v39
  %v113 = vunpack.c.l.b16 %v40
  %v114 = vunpack.c.l.b16 %v41
  %v115 = vunpack.c.l.b16 %v42
  %v116 = vunpack.c.l.b16 %v43
  %v117 = vunpack.c.l.b16 %v44
  %v118 = vunpack.c.l.b16 %v45
  %v119 = vunpack.c.l.b16 %v46
  %v120 = vunpack.c.l.b16 %v47
  %v121 = vunpack.c.l.b16 %v48
  %v122 = vunpack.c.l.b16 %v49
  %v123 = vunpack.c.l.b16 %v50
  %v124 = vunpack.c.l.b16 %v51
  %v125 = vunpack.c.l.b16 %v52
  %v126 = vunpack.c.l.b16 %v53
  %v127 = vunpack.c.l.b16 %v54
  %v128 = vunpack.c.l.b16 %v55
  %v129 = vunpack.c.l.b16 %v56
  %v130 = vunpack.c.l.b16 %v57
  %v131 = vunpack.c.l.b16 %v58
  %v132 = vunpack.c.l.b16 %v59
  %v133 = vunpack.c.l.b16 %v60
  %v134 = vunpack.c.l.b16 %v61
  %v135 = vunpack.c.l.b16 %v62
  %v136 = vunpack.c.l.b16 %v63
  %v137 = vunpack.c.l.b16 %v64
  %v138 = vpack.c.b16 %v107, %v106
  %v139 = vpack.c.b16 %v109, %v108
  %v140 = vpack.c.b16 %v111, %v110
  %v141 = vpack.c.b16 %v113, %v112
  %v142 = vpack.c.b16 %v115, %v114
  %v143 = vpack.c.b16 %v117, %v116
  %v144 = vpack.c.b16 %v119, %v118
  %v145 = vpack.c.b16 %v121, %v120
  %v146 = vpack.c.b16 %v123, %v122
  %v147 = vpack.c.b16 %v125, %v124
  %v148 = vpack.c.b16 %v127, %v126
  %v149 = vpack.c.b16 %v129, %v128
  %v150 = vpack.c.b16 %v131, %v130
  %v151 = vpack.c.b16 %v133, %v132
  %v152 = vpack.c.b16 %v135, %v134
  %v153 = vpack.c.b16 %v137, %v136
  %170 = vmatprep.subr.bf16.mxu0 0
  %171 = vmatpush1.bf16.msra.mxu0 %v138
  %172 = vmatprep.subr.bf16.mxu0 0
  %173 = vmatpush1.bf16.msra.mxu0 %v139
  %174 = vmatprep.subr.bf16.mxu0 0
  %175 = vmatpush1.bf16.msra.mxu0 %v140
  %176 = vmatprep.subr.bf16.mxu0 0
  %177 = vmatpush1.bf16.msra.mxu0 %v141
  %178 = vmatprep.subr.bf16.mxu0 0
  %179 = vmatpush1.bf16.msra.mxu0 %v142
  %180 = vmatprep.subr.bf16.mxu0 0
  %181 = vmatpush1.bf16.msra.mxu0 %v143
  %182 = vmatprep.subr.bf16.mxu0 0
  %183 = vmatpush1.bf16.msra.mxu0 %v144
  %184 = vmatprep.subr.bf16.mxu0 0
  %185 = vmatpush1.bf16.msra.mxu0 %v145
  %186 = vmatprep.subr.bf16.mxu0 0
  %187 = vmatpush1.bf16.msra.mxu0 %v146
  %188 = vmatprep.subr.bf16.mxu0 0
  %189 = vmatpush1.bf16.msra.mxu0 %v147
  %190 = vmatprep.subr.bf16.mxu0 0
  %191 = vmatpush1.bf16.msra.mxu0 %v148
  %192 = vmatprep.subr.bf16.mxu0 0
  %193 = vmatpush1.bf16.msra.mxu0 %v149
  %194 = vmatprep.subr.bf16.mxu0 0
  %195 = vmatpush1.bf16.msra.mxu0 %v150
  %196 = vmatprep.subr.bf16.mxu0 0
  %197 = vmatpush1.bf16.msra.mxu0 %v151
  %198 = vmatprep.subr.bf16.mxu0 0
  %199 = vmatpush1.bf16.msra.mxu0 %v152
  %200 = vmatprep.subr.bf16.mxu0 0
  %201 = vmatpush1.bf16.msra.mxu0 %v153
  %202 = vmatprep.mubr.bf16.mxu0 %v67
  %203 = vmatmul.mubr.bf16.gmra.mrb[0].mxu0 %v66
  %v204 = vpop.f32.mrb[0].mxu0
  %v205 = vadd.f32 %v72, %v204
  %v206 = vpop.f32.mrb[0].mxu0
  %v207 = vpop.f32.mrb[0].mxu0
  %v208 = vpop.f32.mrb[0].mxu0
  %209 = vdwg.mxu0
  %v210 = vmax.f32 %v205, 0.0
  %v211 = vld [vmem:[%s3] sm:$0xf]
  %v212 = vld [vmem:[%s3 + $0x4] sm:$0xf]
  %v213 = vld [vmem:[%s3 + $0x8] sm:$0xf]
  %v214 = vld [vmem:[%s3 + $0xc] sm:$0xf]
  %v215 = vld [vmem:[%s4] sm:$0x1]
  %v216 = vpack.c.bf16 %v210, %v210
  %v218 = vlaneseq
  %v219 = vshrl.u32 %v218, 7
  %v220 = vsub.s32 0, %v219
  %v221 = vrot.slane %v215, %v220
  %v227 = vunpack.c.l.b16 %v211
  %v228 = vunpack.c.l.b16 %v212
  %v229 = vunpack.c.l.b16 %v213
  %v230 = vunpack.c.l.b16 %v214
  %v231 = vpack.c.b16 %v228, %v227
  %v232 = vpack.c.b16 %v230, %v229
  %vm235 = vcmask 261120
  %v237 = vsel %vm235, %v216, 0
  %239 = vmatprep.subr.bf16.mxu0 0
  %240 = vmatpush1.bf16.msra.mxu0 %v231
  %241 = vmatprep.subr.bf16.mxu0 0
  %242 = vmatpush1.bf16.msra.mxu0 %v232
  %243 = vmatprep.subr.bf16.mxu0 0
  %244 = vmatpush1.bf16.msra.mxu0 0
  %245 = vmatprep.subr.bf16.mxu0 0
  %246 = vmatpush1.bf16.msra.mxu0 0
  %247 = vmatprep.subr.bf16.mxu0 0
  %248 = vmatpush1.bf16.msra.mxu0 0
  %249 = vmatprep.subr.bf16.mxu0 0
  %250 = vmatpush1.bf16.msra.mxu0 0
  %251 = vmatprep.subr.bf16.mxu0 0
  %252 = vmatpush1.bf16.msra.mxu0 0
  %253 = vmatprep.subr.bf16.mxu0 0
  %254 = vmatpush1.bf16.msra.mxu0 0
  %255 = vmatprep.subr.bf16.mxu0 0
  %256 = vmatpush1.bf16.msra.mxu0 0
  %257 = vmatprep.subr.bf16.mxu0 0
  %258 = vmatpush1.bf16.msra.mxu0 0
  %259 = vmatprep.subr.bf16.mxu0 0
  %260 = vmatpush1.bf16.msra.mxu0 0
  %261 = vmatprep.subr.bf16.mxu0 0
  %262 = vmatpush1.bf16.msra.mxu0 0
  %263 = vmatprep.subr.bf16.mxu0 0
  %264 = vmatpush1.bf16.msra.mxu0 0
  %265 = vmatprep.subr.bf16.mxu0 0
  %266 = vmatpush1.bf16.msra.mxu0 0
  %267 = vmatprep.subr.bf16.mxu0 0
  %268 = vmatpush1.bf16.msra.mxu0 0
  %269 = vmatprep.subr.bf16.mxu0 0
  %270 = vmatpush1.bf16.msra.mxu0 0
  %271 = vmatprep.mubr.bf16.mxu0 0
  %272 = vmatmul.mubr.bf16.gmra.mrb[0].mxu0 %v237
  %v273 = vpop.f32.mrb[0].mxu0
  %v274 = vadd.f32 %v221, %v273
  %v275 = vpop.f32.mrb[0].mxu0
  %v276 = vpop.f32.mrb[0].mxu0
  %v277 = vpop.f32.mrb[0].mxu0
  %278 = vdwg.mxu0
  %v279 = vmax.f32 %v274, 0.0
  %280 = vst [vmem:[%s5] sm:$0xff] %v279
  // Predicated region
  $region22: #{fwd.1} parent=0 // pred_check
    _
  $region23: #{fwd.1} parent=0 // pred_check_branch
    %282 = sbr.rel (0) target = $region25
  $region24: #{fwd.1} parent=0 // pred_region
    _
  $region25: #{fwd.1} parent=0 // pred_fallthru
    _
  // Predicated region
  $region26: #{fwd.1} parent=0 // pred_check
    _
  $region27: #{fwd.1} parent=0 // pred_check_branch
    %284 = sbr.rel (0) target = $region29
  $region28: #{fwd.1} parent=0 // pred_region
    _
  $region29: #{fwd.1} parent=0 // pred_fallthru
    _

</llo_original>
